<compile_context>
chip_gen: v6e
topology: v6e:2x2x1
jax: 0.10.0
libtpu: 0.0.40
codegen_flags: <defaults>
</compile_context>

<pallas_src>
import functools

import jax
import jax.numpy as jnp
from jax.experimental import pallas as pl
from jax.experimental.pallas import tpu as pltpu


# ------------------------------ helpers ------------------------------------ #
def _round_up(x, m):
    return ((x + m - 1) // m) * m


def _pad_nodes(n):
    """Pad node count: multiple of 128 (lane-dense adjacency K axis), 512 for big graphs."""
    if n <= 128:
        return 128
    if n <= 1024:
        return _round_up(n, 128)
    return _round_up(n, 512)


def _pick_tile(dim, candidates):
    """Largest candidate tile that evenly divides dim (dims are pre-padded)."""
    for c in candidates:
        if dim >= c and dim % c == 0:
            return c
    return dim


def _pick_tile_m(dim, candidates=(1024, 512, 256, 128)):
    """Like _pick_tile but prefers >=2 M-tiles so both v7x TensorCores are used."""
    for c in candidates:
        if dim % c == 0 and dim // c >= 2:
            return c
    for c in candidates:
        if dim >= c and dim % c == 0:
            return c
    return dim


def _pad2d(x, rows, cols, dtype):
    r, c = x.shape
    return jnp.zeros((rows, cols), dtype).at[:r, :c].set(x.astype(dtype))


def _vmem_limit_bytes(tm, tk, tn, a_dtype, b_dtype, out_dtype, has_scale, has_bias):
    """Tile-derived, generation-aware VMEM limit (double-buffered blocks + headroom)."""
    a_i = jnp.dtype(a_dtype).itemsize
    b_i = jnp.dtype(b_dtype).itemsize
    o_i = jnp.dtype(out_dtype).itemsize
    blocks = (2 * tm * tk * a_i          # LHS, double-buffered
              + 2 * tk * tn * b_i        # RHS, double-buffered
              + 2 * tm * tn * o_i        # output, double-buffered
              + tm * tn * 4)             # f32 accumulator
    if has_scale:
        blocks += 2 * tm * 4
    if has_bias:
        blocks += 2 * tn * 4
    want = 2 * blocks + (8 << 20)        # headroom for compiler scratch
    try:
        cap = int(pltpu.get_tpu_info().vmem_capacity_bytes)
    except Exception:                    # pragma: no cover - fallback if query unavailable
        cap = 64 << 20                   # conservative (v7x physical VMEM)
    return int(max(32 << 20, min(want, (cap * 3) // 4)))


# --------------------------- Pallas matmul kernel --------------------------- #
def _tiled_matmul_kernel(*refs, has_scale, has_bias, apply_relu):
    idx = 0
    a_ref = refs[idx]; idx += 1
    b_ref = refs[idx]; idx += 1
    scale_ref = None
    bias_ref = None
    if has_scale:
        scale_ref = refs[idx]; idx += 1
    if has_bias:
        bias_ref = refs[idx]; idx += 1
    o_ref = refs[idx]; idx += 1
    acc_ref = refs[idx]

    @pl.when(pl.program_id(2) == 0)
    def _():
        acc_ref[...] = jnp.zeros_like(acc_ref)

    lhs = a_ref[...]
    if lhs.dtype != b_ref.dtype:
        # int8 (A + I) tile -> bf16 on the VPU; HBM streamed at 1 byte/entry.
        lhs = lhs.astype(b_ref.dtype)
    acc_ref[...] += jnp.dot(lhs, b_ref[...], preferred_element_type=jnp.float32)

    @pl.when(pl.program_id(2) == pl.num_programs(2) - 1)
    def _():
        out = acc_ref[...]
        if scale_ref is not None:          # f32 D^{-1/2} row scale, exactly once
            out = out * scale_ref[...]
        if bias_ref is not None:           # bias added exactly once, at writeback
            out = out + bias_ref[...]
        if apply_relu:
            out = jnp.maximum(out, 0.0)
        o_ref[...] = out.astype(o_ref.dtype)


def tiled_matmul(a, b, *, row_scale=None, bias=None, apply_relu=False,
                 out_dtype=jnp.bfloat16):
    """out = row_scale * (a @ b) (+ bias) (relu?), tiled over an (M, N, K) grid."""
    M, K = a.shape
    K2, N = b.shape
    assert K == K2, (a.shape, b.shape)

    tm = _pick_tile_m(M)
    tk = _pick_tile(K, (2048, 1024, 512, 256, 128))
    tn = _pick_tile(N, (256, 128))
    grid = (M // tm, N // tn, K // tk)

    in_specs = [
        pl.BlockSpec((tm, tk), lambda i, j, k: (i, k)),   # LHS (bf16 or int8 adjacency)
        pl.BlockSpec((tk, tn), lambda i, j, k: (k, j)),   # RHS (bf16)
    ]
    operands = [a, b]
    if row_scale is not None:
        in_specs.append(pl.BlockSpec((tm, 1), lambda i, j, k: (i, 0)))
        operands.append(row_scale.reshape(M, 1).astype(jnp.float32))
    if bias is not None:
        in_specs.append(pl.BlockSpec((1, tn), lambda i, j, k: (0, j)))
        operands.append(bias.reshape(1, N).astype(jnp.float32))

    kernel = functools.partial(
        _tiled_matmul_kernel,
        has_scale=row_scale is not None,
        has_bias=bias is not None,
        apply_relu=apply_relu)

    vmem_limit = _vmem_limit_bytes(tm, tk, tn, a.dtype, b.dtype, out_dtype,
                                   row_scale is not None, bias is not None)

    return pl.pallas_call(
        kernel,
        out_shape=jax.ShapeDtypeStruct((M, N), out_dtype),
        grid_spec=pltpu.PrefetchScalarGridSpec(
            num_scalar_prefetch=0,
            grid=grid,
            in_specs=in_specs,
            out_specs=pl.BlockSpec((tm, tn), lambda i, j, k: (i, j)),
            scratch_shapes=[pltpu.VMEM((tm, tn), jnp.float32)],
        ),
        compiler_params=pltpu.CompilerParams(
            dimension_semantics=("parallel", "parallel", "arbitrary"),
            vmem_limit_bytes=vmem_limit,
        ),
    )(*operands)


# ------------------------------ JAX glue ----------------------------------- #
def build_adjacency_and_norm(edge_index, num_nodes, n_pad):
    """(A + I) as int8 [n_pad, n_pad] plus f32 d_inv_sqrt [n_pad].

    PyG gcn_norm semantics: duplicate (non-self-loop) edges are summed; the
    diagonal is forced to exactly 1 (add_remaining_self_loops).  Degrees are
    computed O(E) with scatter-adds; no N^2 float temporaries are built.
    """
    src = edge_index[0].astype(jnp.int32)
    dst = edge_index[1].astype(jnp.int32)
    idx = jnp.arange(num_nodes, dtype=jnp.int32)

    # (A + I) directly in its final 1-byte storage dtype.  message j -> i  => A[i, j].
    # (int8 overflows only if a single edge repeats >127 times.)
    adj = jnp.zeros((n_pad, n_pad), jnp.int8)
    adj = adj.at[dst, src].add(jnp.ones(src.shape, jnp.int8))
    adj = adj.at[idx, idx].set(jnp.int8(1))          # diagonal forced to exactly 1

    # deg[i] = 1 (self-loop) + #incoming non-self-loop edges; padded rows -> 0.
    not_self = (src != dst).astype(jnp.float32)
    deg = jnp.zeros((n_pad,), jnp.float32)
    deg = deg.at[idx].add(1.0)
    deg = deg.at[dst].add(not_self)
    d_inv_sqrt = jnp.where(deg > 0, jax.lax.rsqrt(deg), 0.0)
    return adj, d_inv_sqrt


def gcn_forward(x, edge_index, params):
    n, f_in = x.shape
    hidden = params["w1"].shape[1]
    num_classes = params["w2"].shape[1]

    n_pad = _pad_nodes(n)
    f_in_pad = _round_up(f_in, 128)
    h_pad = _round_up(hidden, 128)
    c_pad = _round_up(num_classes, 128)

    adj, d_inv_sqrt = build_adjacency_and_norm(edge_index, n, n_pad)
    scale = d_inv_sqrt.reshape(n_pad, 1)                       # f32 row scale

    x_p = _pad2d(x, n_pad, f_in_pad, jnp.bfloat16)
    w1_p = _pad2d(params["w1"], f_in_pad, h_pad, jnp.bfloat16)
    w2_p = _pad2d(params["w2"], h_pad, c_pad, jnp.bfloat16)
    b1_p = jnp.zeros((1, h_pad), jnp.float32).at[0, :hidden].set(params["b1"])
    b2_p = jnp.zeros((1, c_pad), jnp.float32).at[0, :num_classes].set(params["b2"])

    # Layer 1: relu(D^-1/2 (A+I) D^-1/2 X W1 + b1)
    h1 = tiled_matmul(x_p, w1_p, row_scale=scale)                        # D^-1/2 (X W1)
    z1 = tiled_matmul(adj, h1, row_scale=scale, bias=b1_p,
                      apply_relu=True)                                   # [N, H] bf16

    # Layer 2: D^-1/2 (A+I) D^-1/2 Z1 W2 + b2
    h2 = tiled_matmul(z1, w2_p, row_scale=scale)                         # D^-1/2 (Z1 W2)
    z2 = tiled_matmul(adj, h2, row_scale=scale, bias=b2_p,
                      apply_relu=False, out_dtype=jnp.float32)           # [N, C] f32

    return z2[:n, :num_classes]


def init_params(key, input_dim, hidden_dim, num_classes):
    k1, k2 = jax.random.split(key)

    def glorot(k, fan_in, fan_out):
        limit = jnp.sqrt(6.0 / (fan_in + fan_out))
        return jax.random.uniform(
            k, (fan_in, fan_out), jnp.float32, -limit, limit)

    return {
        "w1": glorot(k1, input_dim, hidden_dim),
        "b1": jnp.zeros((hidden_dim,), jnp.float32),
        "w2": glorot(k2, hidden_dim, num_classes),
        "b2": jnp.zeros((num_classes,), jnp.float32),
    }


# -------------------------------- Driver ------------------------------------ #
if __name__ == "__main__":
    key = jax.random.PRNGKey(0)
    k_x, k_e, k_p = jax.random.split(key, 3)

    num_nodes = 16
    input_dim = 8
    hidden_dim = 32
    num_classes = 4
    num_edges = 40

    # Node features [N, F_in]
    x = jax.random.normal(k_x, (num_nodes, input_dim), jnp.float32)

    # Random directed edge_index [2, E]; symmetrize (typical for GCN)
    e = jax.random.randint(k_e, (2, num_edges), 0, num_nodes, jnp.int32)
    edge_index = jnp.concatenate([e, e[::-1]], axis=1)  # [2, 2E]

    params = init_params(k_p, input_dim, hidden_dim, num_classes)

    out = gcn_forward(x, edge_index, params)
    jax.block_until_ready(out)
    assert out.shape == (num_nodes, num_classes)
    assert bool(jnp.all(jnp.isfinite(out)))
    print("KERNEL_OK")
</pallas_src>

<mosaic_0001>
module attributes {stable_mosaic.version = 11 : i64} {
  func.func @_tiled_matmul_kernel(%arg0: i32, %arg1: i32, %arg2: i32, %arg3: memref<128x128xbf16, #tpu.memory_space<vmem>>, %arg4: memref<128x128xbf16, #tpu.memory_space<vmem>>, %arg5: memref<128x1xf32, #tpu.memory_space<vmem>>, %arg6: memref<128x128xbf16, #tpu.memory_space<vmem>>, %arg7: memref<128x128xf32, #tpu.memory_space<vmem>>) attributes {dimension_semantics = [#tpu.dimension_semantics<parallel>, #tpu.dimension_semantics<parallel>, #tpu.dimension_semantics<arbitrary>], iteration_bounds = array<i64: 1, 1, 1>, scalar_prefetch = 0 : i64, scratch_operands = 1 : i64, tpu.core_type = #tpu.core_type<tc>, window_params = [{transform_indices = @transform_0, window_bounds = array<i64: 128, 128>}, {transform_indices = @transform_1, window_bounds = array<i64: 128, 128>}, {transform_indices = @transform_2, window_bounds = array<i64: 128, 1>}, {transform_indices = @transform_3, window_bounds = array<i64: 128, 128>}]} {
    %c0_i32 = arith.constant 0 : i32
    %0 = arith.cmpi eq, %arg2, %c0_i32 : i32
    %1 = arith.extui %0 : i1 to i32
    %c0_i32_0 = arith.constant 0 : i32
    %2 = arith.cmpi ne, %1, %c0_i32_0 : i32
    scf.if %2 {
      %cst_10 = arith.constant 0.000000e+00 : f32
      %12 = vector.broadcast %cst_10 : f32 to vector<128x128xf32>
      %c0_11 = arith.constant 0 : index
      %c0_12 = arith.constant 0 : index
      %13 = vector.load %arg7[%c0_11, %c0_12] : memref<128x128xf32, #tpu.memory_space<vmem>>, vector<128x128xf32>
      tpu.vector_store %arg7[%c0_11, %c0_12], %12 {strides = array<i32>} : memref<128x128xf32, #tpu.memory_space<vmem>>, vector<128x128xf32>,
    } else {
    }
    %c0 = arith.constant 0 : index
    %c0_1 = arith.constant 0 : index
    %3 = vector.load %arg3[%c0, %c0_1] : memref<128x128xbf16, #tpu.memory_space<vmem>>, vector<128x128xbf16>
    %c0_2 = arith.constant 0 : index
    %c0_3 = arith.constant 0 : index
    %4 = vector.load %arg7[%c0_2, %c0_3] : memref<128x128xf32, #tpu.memory_space<vmem>>, vector<128x128xf32>
    %c0_4 = arith.constant 0 : index
    %c0_5 = arith.constant 0 : index
    %5 = vector.load %arg4[%c0_4, %c0_5] : memref<128x128xbf16, #tpu.memory_space<vmem>>, vector<128x128xbf16>
    %cst = arith.constant dense<0.000000e+00> : vector<128x128xf32>
    %6 = tpu.matmul %3, %5, %cst {dimension_numbers = #tpu.dot_dimension_numbers<[1], [0], [0], [1], [0, 0, 1, 1], [], []>} : vector<128x128xbf16>, vector<128x128xbf16>, vector<128x128xf32> -> vector<128x128xf32>
    %7 = arith.addf %4, %6 : vector<128x128xf32>
    %c0_6 = arith.constant 0 : index
    %c0_7 = arith.constant 0 : index
    %8 = vector.load %arg7[%c0_6, %c0_7] : memref<128x128xf32, #tpu.memory_space<vmem>>, vector<128x128xf32>
    tpu.vector_store %arg7[%c0_6, %c0_7], %7 {strides = array<i32>} : memref<128x128xf32, #tpu.memory_space<vmem>>, vector<128x128xf32>,
    %c0_i32_8 = arith.constant 0 : i32
    %9 = arith.cmpi eq, %arg2, %c0_i32_8 : i32
    %10 = arith.extui %9 : i1 to i32
    %c0_i32_9 = arith.constant 0 : i32
    %11 = arith.cmpi ne, %10, %c0_i32_9 : i32
    scf.if %11 {
      %c0_10 = arith.constant 0 : index
      %c0_11 = arith.constant 0 : index
      %12 = vector.load %arg7[%c0_10, %c0_11] : memref<128x128xf32, #tpu.memory_space<vmem>>, vector<128x128xf32>
      %c0_12 = arith.constant 0 : index
      %c0_13 = arith.constant 0 : index
      %13 = vector.load %arg5[%c0_12, %c0_13] : memref<128x1xf32, #tpu.memory_space<vmem>>, vector<128x1xf32>
      %14 = vector.broadcast %13 : vector<128x1xf32> to vector<128x128xf32>
      %15 = arith.mulf %12, %14 : vector<128x128xf32>
      %16 = arith.truncf %15 : vector<128x128xf32> to vector<128x128xbf16>
      %c0_14 = arith.constant 0 : index
      %c0_15 = arith.constant 0 : index
      %17 = vector.load %arg6[%c0_14, %c0_15] : memref<128x128xbf16, #tpu.memory_space<vmem>>, vector<128x128xbf16>
      tpu.vector_store %arg6[%c0_14, %c0_15], %16 {strides = array<i32>} : memref<128x128xbf16, #tpu.memory_space<vmem>>, vector<128x128xbf16>,
    } else {
    }
    return
  }
  func.func @transform_0(%arg0: i32, %arg1: i32, %arg2: i32) -> (i32, i32) {
    %c0_i32 = arith.constant 0 : i32
    return %arg0, %arg2 : i32, i32
  }
  func.func @transform_1(%arg0: i32, %arg1: i32, %arg2: i32) -> (i32, i32) {
    %c0_i32 = arith.constant 0 : i32
    return %arg2, %arg1 : i32, i32
  }
  func.func @transform_2(%arg0: i32, %arg1: i32, %arg2: i32) -> (i32, i32) {
    %c0_i32 = arith.constant 0 : i32
    %c0_i32_0 = arith.constant 0 : i32
    return %arg0, %c0_i32 : i32, i32
  }
  func.func @transform_3(%arg0: i32, %arg1: i32, %arg2: i32) -> (i32, i32) {
    %c0_i32 = arith.constant 0 : i32
    return %arg0, %arg1 : i32, i32
  }
}

</mosaic_0001>

<llo_original>
// kernel: tpu_custom_call.1
$region0: #{tpu_custom_call.1}
  #allocation0 [shape = 'u32[]', space=smem, size = 0x4, offset = 0x4, fixed_abs, tag = 'smem constant byte address 0x4 - core index']
  #allocation1 [shape = 'u32[144,128]{1,0:T(1,128)}', space=vmem, size = 0x12000, scoped, tag = 'internal scratch']
  #allocation2 [shape = 'f32[128,128]{1,0:T(8,128)}', space=vmem, size = 0x10000, scoped, tag = 'scratch operand']
  %s0 = inlined_call_operand.vmem [shape: bf16[128,128], index: 0, kind: input, shape index: {}]
  %s1 = inlined_call_operand.vmem [shape: bf16[128,128], index: 1, kind: input, shape index: {}]
  %s2 = inlined_call_operand.vmem [shape: f32[128,1], index: 2, kind: input, shape index: {}]
  %s3 = inlined_call_operand.hbm [shape: bf16[128,128], index: 3, kind: output, shape index: {}]
  %s4 = sld [smem:[#allocation0]]
  $region30: #{tpu_custom_call.1} parent=0
    _
  %s6 = ssub.s32 1, %s4
  %s7 = scalar_select 0, %s6, %s4
  $region1: #{tpu_custom_call.1} parent=0
    #allocation3 [shape = 'u8[32768]{0}', space=vmem, size = 0x8000, scoped, tag = 'output window, operand 0, single buffered']
    #allocation4 [shape = 's32[1]{0}', space=sflag, size = 0x4, scoped, tag = 'scoped memory for tpu_custom_call.1']
    %8 = vsyncpa [#allocation4], 0
    // Predicated region
    $region2: #{tpu_custom_call.1} parent=1 // pred_check
      _
    $region3: #{tpu_custom_call.1} parent=1 // pred_check_branch
      %10 = sbr.rel (0) target = $region5
    $region4: #{tpu_custom_call.1} parent=1 // pred_region
      _
    $region5: #{tpu_custom_call.1} parent=1 // pred_fallthru
      _
    // Predicated region
    $region6: #{tpu_custom_call.1} parent=1 // pred_check
      _
    $region7: #{tpu_custom_call.1} parent=1 // pred_check_branch
      %12 = sbr.rel (0) target = $region9
    $region8: #{tpu_custom_call.1} parent=1 // pred_region
      _
    $region9: #{tpu_custom_call.1} parent=1 // pred_fallthru
      _
    // Predicated region
    $region10: #{tpu_custom_call.1} parent=1 // pred_check
      _
    $region11: #{tpu_custom_call.1} parent=1 // pred_check_branch
      %14 = sbr.rel (0) target = $region13
    $region12: #{tpu_custom_call.1} parent=1 // pred_region
      _
    $region13: #{tpu_custom_call.1} parent=1 // pred_fallthru
      _
    %p16 = scmp.eq.s32.totalorder 0, 0
    // Predicated region
    $region14: #{tpu_custom_call.1} parent=1 // pred_check
      %p17 = pneg %p16
    $region15: #{tpu_custom_call.1} parent=1 // pred_check_branch
      %19 = sbr.rel (%p17) target = $region17
    $region16: #{tpu_custom_call.1} parent=1 // pred_region
      %20 = vst [vmem:[#allocation2] sm:$0xff] 0.0
      %21 = vst [vmem:[#allocation2 + $0x8] sm:$0xff] 0.0
      %22 = vst [vmem:[#allocation2 + $0x10] sm:$0xff] 0.0
      %23 = vst [vmem:[#allocation2 + $0x18] sm:$0xff] 0.0
      %24 = vst [vmem:[#allocation2 + $0x20] sm:$0xff] 0.0
      %25 = vst [vmem:[#allocation2 + $0x28] sm:$0xff] 0.0
      %26 = vst [vmem:[#allocation2 + $0x30] sm:$0xff] 0.0
      %27 = vst [vmem:[#allocation2 + $0x38] sm:$0xff] 0.0
      %28 = vst [vmem:[#allocation2 + $0x40] sm:$0xff] 0.0
      %29 = vst [vmem:[#allocation2 + $0x48] sm:$0xff] 0.0
      %30 = vst [vmem:[#allocation2 + $0x50] sm:$0xff] 0.0
      %31 = vst [vmem:[#allocation2 + $0x58] sm:$0xff] 0.0
      %32 = vst [vmem:[#allocation2 + $0x60] sm:$0xff] 0.0
      %33 = vst [vmem:[#allocation2 + $0x68] sm:$0xff] 0.0
      %34 = vst [vmem:[#allocation2 + $0x70] sm:$0xff] 0.0
      %35 = vst [vmem:[#allocation2 + $0x78] sm:$0xff] 0.0
    $region17: #{tpu_custom_call.1} parent=1 // pred_fallthru
      _
    %v36 = vld [vmem:[%s0] sm:$0xf]
    %v37 = vld [vmem:[%s0 + $0x4] sm:$0xf]
    %v38 = vld [vmem:[%s0 + $0x8] sm:$0xf]
    %v39 = vld [vmem:[%s0 + $0xc] sm:$0xf]
    %v40 = vld [vmem:[%s0 + $0x10] sm:$0xf]
    %v41 = vld [vmem:[%s0 + $0x14] sm:$0xf]
    %v42 = vld [vmem:[%s0 + $0x18] sm:$0xf]
    %v43 = vld [vmem:[%s0 + $0x1c] sm:$0xf]
    %v44 = vld [vmem:[%s0 + $0x20] sm:$0xf]
    %v45 = vld [vmem:[%s0 + $0x24] sm:$0xf]
    %v46 = vld [vmem:[%s0 + $0x28] sm:$0xf]
    %v47 = vld [vmem:[%s0 + $0x2c] sm:$0xf]
    %v48 = vld [vmem:[%s0 + $0x30] sm:$0xf]
    %v49 = vld [vmem:[%s0 + $0x34] sm:$0xf]
    %v50 = vld [vmem:[%s0 + $0x38] sm:$0xf]
    %v51 = vld [vmem:[%s0 + $0x3c] sm:$0xf]
    %v52 = vld [vmem:[#allocation2] sm:$0xff]
    %v53 = vld [vmem:[#allocation2 + $0x8] sm:$0xff]
    %v54 = vld [vmem:[#allocation2 + $0x10] sm:$0xff]
    %v55 = vld [vmem:[#allocation2 + $0x18] sm:$0xff]
    %v56 = vld [vmem:[#allocation2 + $0x20] sm:$0xff]
    %v57 = vld [vmem:[#allocation2 + $0x28] sm:$0xff]
    %v58 = vld [vmem:[#allocation2 + $0x30] sm:$0xff]
    %v59 = vld [vmem:[#allocation2 + $0x38] sm:$0xff]
    %v60 = vld [vmem:[#allocation2 + $0x40] sm:$0xff]
    %v61 = vld [vmem:[#allocation2 + $0x48] sm:$0xff]
    %v62 = vld [vmem:[#allocation2 + $0x50] sm:$0xff]
    %v63 = vld [vmem:[#allocation2 + $0x58] sm:$0xff]
    %v64 = vld [vmem:[#allocation2 + $0x60] sm:$0xff]
    %v65 = vld [vmem:[#allocation2 + $0x68] sm:$0xff]
    %v66 = vld [vmem:[#allocation2 + $0x70] sm:$0xff]
    %v67 = vld [vmem:[#allocation2 + $0x78] sm:$0xff]
    %v68 = vld [vmem:[%s1] sm:$0xf]
    %v69 = vld [vmem:[%s1 + $0x4] sm:$0xf]
    %v70 = vld [vmem:[%s1 + $0x8] sm:$0xf]
    %v71 = vld [vmem:[%s1 + $0xc] sm:$0xf]
    %v72 = vld [vmem:[%s1 + $0x10] sm:$0xf]
    %v73 = vld [vmem:[%s1 + $0x14] sm:$0xf]
    %v74 = vld [vmem:[%s1 + $0x18] sm:$0xf]
    %v75 = vld [vmem:[%s1 + $0x1c] sm:$0xf]
    %v76 = vld [vmem:[%s1 + $0x20] sm:$0xf]
    %v77 = vld [vmem:[%s1 + $0x24] sm:$0xf]
    %v78 = vld [vmem:[%s1 + $0x28] sm:$0xf]
    %v79 = vld [vmem:[%s1 + $0x2c] sm:$0xf]
    %v80 = vld [vmem:[%s1 + $0x30] sm:$0xf]
    %v81 = vld [vmem:[%s1 + $0x34] sm:$0xf]
    %v82 = vld [vmem:[%s1 + $0x38] sm:$0xf]
    %v83 = vld [vmem:[%s1 + $0x3c] sm:$0xf]
    %v100 = vunpack.c.l.b16 %v36
    %v101 = vunpack.c.l.b16 %v37
    %v102 = vunpack.c.l.b16 %v38
    %v103 = vunpack.c.l.b16 %v39
    %v104 = vunpack.c.l.b16 %v40
    %v105 = vunpack.c.l.b16 %v41
    %v106 = vunpack.c.l.b16 %v42
    %v107 = vunpack.c.l.b16 %v43
    %v108 = vunpack.c.l.b16 %v44
    %v109 = vunpack.c.l.b16 %v45
    %v110 = vunpack.c.l.b16 %v46
    %v111 = vunpack.c.l.b16 %v47
    %v112 = vunpack.c.l.b16 %v48
    %v113 = vunpack.c.l.b16 %v49
    %v114 = vunpack.c.l.b16 %v50
    %v115 = vunpack.c.l.b16 %v51
    %v116 = vpack.c.b16 %v101, %v100
    %v117 = vpack.c.b16 %v103, %v102
    %v118 = vpack.c.b16 %v105, %v104
    %v119 = vpack.c.b16 %v107, %v106
    %v120 = vpack.c.b16 %v109, %v108
    %v121 = vpack.c.b16 %v111, %v110
    %v122 = vpack.c.b16 %v113, %v112
    %v123 = vpack.c.b16 %v115, %v114
    %v148 = vunpack.c.l.b16 %v68
    %v149 = vunpack.c.l.b16 %v69
    %v150 = vunpack.c.l.b16 %v70
    %v151 = vunpack.c.l.b16 %v71
    %v152 = vunpack.c.l.b16 %v72
    %v153 = vunpack.c.l.b16 %v73
    %v154 = vunpack.c.l.b16 %v74
    %v155 = vunpack.c.l.b16 %v75
    %v156 = vunpack.c.l.b16 %v76
    %v157 = vunpack.c.l.b16 %v77
    %v158 = vunpack.c.l.b16 %v78
    %v159 = vunpack.c.l.b16 %v79
    %v160 = vunpack.c.l.b16 %v80
    %v161 = vunpack.c.l.b16 %v81
    %v162 = vunpack.c.l.b16 %v82
    %v163 = vunpack.c.l.b16 %v83
    %v164 = vpack.c.b16 %v149, %v148
    %v165 = vpack.c.b16 %v151, %v150
    %v166 = vpack.c.b16 %v153, %v152
    %v167 = vpack.c.b16 %v155, %v154
    %v168 = vpack.c.b16 %v157, %v156
    %v169 = vpack.c.b16 %v159, %v158
    %v170 = vpack.c.b16 %v161, %v160
    %v171 = vpack.c.b16 %v163, %v162
    %180 = vmatprep.subr.bf16.mxu0 0
    %181 = vmatpush1.bf16.msra.mxu0 %v171
    %182 = vmatprep.subr.bf16.mxu0 0
    %183 = vmatpush1.bf16.msra.mxu0 %v170
    %184 = vmatprep.subr.bf16.mxu0 0
    %185 = vmatpush1.bf16.msra.mxu0 %v169
    %186 = vmatprep.subr.bf16.mxu0 0
    %187 = vmatpush1.bf16.msra.mxu0 %v168
    %188 = vmatprep.subr.bf16.mxu0 0
    %189 = vmatpush1.bf16.msra.mxu0 %v167
    %190 = vmatprep.subr.bf16.mxu0 0
    %191 = vmatpush1.bf16.msra.mxu0 %v166
    %192 = vmatprep.subr.bf16.mxu0 0
    %193 = vmatpush1.bf16.msra.mxu0 %v165
    %194 = vmatprep.subr.bf16.mxu0 0
    %195 = vmatpush1.bf16.msra.mxu0 %v164
    %196 = vmatprep.subr.bf16.mxu0 0
    %197 = vmatpush2.bf16.msra.mxu0 0
    %198 = vmatprep.subr.bf16.mxu0 0
    %199 = vmatpush2.bf16.msra.mxu0 0
    %200 = vmatprep.subr.bf16.mxu0 0
    %201 = vmatpush2.bf16.msra.mxu0 0
    %202 = vmatprep.subr.bf16.mxu0 0
    %203 = vmatpush2.bf16.msra.mxu0 0
    %204 = vmatprep.subr.bf16.mxu0 0
    %205 = vmatpush2.bf16.msra.mxu0 0
    %206 = vmatprep.subr.bf16.mxu0 0
    %207 = vmatpush2.bf16.msra.mxu0 0
    %208 = vmatprep.subr.bf16.mxu0 0
    %209 = vmatpush2.bf16.msra.mxu0 0
    %210 = vmatprep.subr.bf16.mxu0 0
    %211 = vmatpush2.bf16.msra.mxu0 0
    %212 = vmatprep.mubr.bf16.mxu0 0
    %213 = vmatmul.mubr.bf16.gmra.mxu0 %v116
    %v214 = vpop.f32.mrf.mxu0
    %v215 = vadd.f32 0.0, %v214
    %v216 = vpop.f32.mrf.mxu0
    %v217 = vpop.f32.mrf.mxu0
    %v218 = vadd.f32 0.0, %v217
    %v219 = vpop.f32.mrf.mxu0
    %220 = vmatprep.mubr.bf16.mxu0 0
    %221 = vmatmul.mubr.bf16.gmra.mxu0 %v117
    %v222 = vpop.f32.mrf.mxu0
    %v223 = vadd.f32 0.0, %v222
    %v224 = vpop.f32.mrf.mxu0
    %v225 = vpop.f32.mrf.mxu0
    %v226 = vadd.f32 0.0, %v225
    %v227 = vpop.f32.mrf.mxu0
    %228 = vmatprep.mubr.bf16.mxu0 0
    %229 = vmatmul.mubr.bf16.gmra.mxu0 %v118
    %v230 = vpop.f32.mrf.mxu0
    %v231 = vadd.f32 0.0, %v230
    %v232 = vpop.f32.mrf.mxu0
    %v233 = vpop.f32.mrf.mxu0
    %v234 = vadd.f32 0.0, %v233
    %v235 = vpop.f32.mrf.mxu0
    %236 = vmatprep.mubr.bf16.mxu0 0
    %237 = vmatmul.mubr.bf16.gmra.mxu0 %v119
    %v238 = vpop.f32.mrf.mxu0
    %v239 = vadd.f32 0.0, %v238
    %v240 = vpop.f32.mrf.mxu0
    %v241 = vpop.f32.mrf.mxu0
    %v242 = vadd.f32 0.0, %v241
    %v243 = vpop.f32.mrf.mxu0
    %244 = vmatprep.mubr.bf16.mxu0 0
    %245 = vmatmul.mubr.bf16.gmra.mxu0 %v120
    %v246 = vpop.f32.mrf.mxu0
    %v247 = vadd.f32 0.0, %v246
    %v248 = vpop.f32.mrf.mxu0
    %v249 = vpop.f32.mrf.mxu0
    %v250 = vadd.f32 0.0, %v249
    %v251 = vpop.f32.mrf.mxu0
    %252 = vmatprep.mubr.bf16.mxu0 0
    %253 = vmatmul.mubr.bf16.gmra.mxu0 %v121
    %v254 = vpop.f32.mrf.mxu0
    %v255 = vadd.f32 0.0, %v254
    %v256 = vpop.f32.mrf.mxu0
    %v257 = vpop.f32.mrf.mxu0
    %v258 = vadd.f32 0.0, %v257
    %v259 = vpop.f32.mrf.mxu0
    %260 = vmatprep.mubr.bf16.mxu0 0
    %261 = vmatmul.mubr.bf16.gmra.mxu0 %v122
    %v262 = vpop.f32.mrf.mxu0
    %v263 = vadd.f32 0.0, %v262
    %v264 = vpop.f32.mrf.mxu0
    %v265 = vpop.f32.mrf.mxu0
    %v266 = vadd.f32 0.0, %v265
    %v267 = vpop.f32.mrf.mxu0
    %268 = vmatprep.mubr.bf16.mxu0 0
    %269 = vmatmul.mubr.bf16.gmra.mxu0 %v123
    %v270 = vpop.f32.mrf.mxu0
    %v271 = vadd.f32 0.0, %v270
    %v272 = vpop.f32.mrf.mxu0
    %v273 = vpop.f32.mrf.mxu0
    %v274 = vadd.f32 0.0, %v273
    %v275 = vpop.f32.mrf.mxu0
    %276 = vdwg.mxu0
    %v277 = vadd.f32 %v52, %v215
    %v278 = vadd.f32 %v53, %v218
    %v279 = vadd.f32 %v54, %v223
    %v280 = vadd.f32 %v55, %v226
    %v281 = vadd.f32 %v56, %v231
    %v282 = vadd.f32 %v57, %v234
    %v283 = vadd.f32 %v58, %v239
    %v284 = vadd.f32 %v59, %v242
    %v285 = vadd.f32 %v60, %v247
    %v286 = vadd.f32 %v61, %v250
    %v287 = vadd.f32 %v62, %v255
    %v288 = vadd.f32 %v63, %v258
    %v289 = vadd.f32 %v64, %v263
    %v290 = vadd.f32 %v65, %v266
    %v291 = vadd.f32 %v66, %v271
    %v292 = vadd.f32 %v67, %v274
    %293 = vst [vmem:[#allocation2] sm:$0xff] %v277
    %294 = vst [vmem:[#allocation2 + $0x8] sm:$0xff] %v278
    %295 = vst [vmem:[#allocation2 + $0x10] sm:$0xff] %v279
    %296 = vst [vmem:[#allocation2 + $0x18] sm:$0xff] %v280
    %297 = vst [vmem:[#allocation2 + $0x20] sm:$0xff] %v281
    %298 = vst [vmem:[#allocation2 + $0x28] sm:$0xff] %v282
    %299 = vst [vmem:[#allocation2 + $0x30] sm:$0xff] %v283
    %300 = vst [vmem:[#allocation2 + $0x38] sm:$0xff] %v284
    %301 = vst [vmem:[#allocation2 + $0x40] sm:$0xff] %v285
    %302 = vst [vmem:[#allocation2 + $0x48] sm:$0xff] %v286
    %303 = vst [vmem:[#allocation2 + $0x50] sm:$0xff] %v287
    %304 = vst [vmem:[#allocation2 + $0x58] sm:$0xff] %v288
    %305 = vst [vmem:[#allocation2 + $0x60] sm:$0xff] %v289
    %306 = vst [vmem:[#allocation2 + $0x68] sm:$0xff] %v290
    %307 = vst [vmem:[#allocation2 + $0x70] sm:$0xff] %v291
    %308 = vst [vmem:[#allocation2 + $0x78] sm:$0xff] %v292
    // Predicated region
    $region18: #{tpu_custom_call.1} parent=1 // pred_check
      %p309 = pneg %p16
    $region19: #{tpu_custom_call.1} parent=1 // pred_check_branch
      %311 = sbr.rel (%p309) target = $region21
    $region20: #{tpu_custom_call.1} parent=1 // pred_region
      %v312 = vld [vmem:[#allocation2] sm:$0xff]
      %v313 = vld [vmem:[#allocation2 + $0x8] sm:$0xff]
      %v314 = vld [vmem:[#allocation2 + $0x10] sm:$0xff]
      %v315 = vld [vmem:[#allocation2 + $0x18] sm:$0xff]
      %v316 = vld [vmem:[#allocation2 + $0x20] sm:$0xff]
      %v317 = vld [vmem:[#allocation2 + $0x28] sm:$0xff]
      %v318 = vld [vmem:[#allocation2 + $0x30] sm:$0xff]
      %v319 = vld [vmem:[#allocation2 + $0x38] sm:$0xff]
      %v320 = vld [vmem:[#allocation2 + $0x40] sm:$0xff]
      %v321 = vld [vmem:[#allocation2 + $0x48] sm:$0xff]
      %v322 = vld [vmem:[#allocation2 + $0x50] sm:$0xff]
      %v323 = vld [vmem:[#allocation2 + $0x58] sm:$0xff]
      %v324 = vld [vmem:[#allocation2 + $0x60] sm:$0xff]
      %v325 = vld [vmem:[#allocation2 + $0x68] sm:$0xff]
      %v326 = vld [vmem:[#allocation2 + $0x70] sm:$0xff]
      %v327 = vld [vmem:[#allocation2 + $0x78] sm:$0xff]
      %v328 = vld [vmem:[%s2] sm:$0xff]
      %v329 = vld [vmem:[%s2 + $0x8] sm:$0xff]
      %v330 = vld [vmem:[%s2 + $0x10] sm:$0xff]
      %v331 = vld [vmem:[%s2 + $0x18] sm:$0xff]
      %v332 = vld [vmem:[%s2 + $0x20] sm:$0xff]
      %v333 = vld [vmem:[%s2 + $0x28] sm:$0xff]
      %v334 = vld [vmem:[%s2 + $0x30] sm:$0xff]
      %v335 = vld [vmem:[%s2 + $0x38] sm:$0xff]
      %v336 = vld [vmem:[%s2 + $0x40] sm:$0xff]
      %v337 = vld [vmem:[%s2 + $0x48] sm:$0xff]
      %v338 = vld [vmem:[%s2 + $0x50] sm:$0xff]
      %v339 = vld [vmem:[%s2 + $0x58] sm:$0xff]
      %v340 = vld [vmem:[%s2 + $0x60] sm:$0xff]
      %v341 = vld [vmem:[%s2 + $0x68] sm:$0xff]
      %v342 = vld [vmem:[%s2 + $0x70] sm:$0xff]
      %v343 = vld [vmem:[%s2 + $0x78] sm:$0xff]
      %345 = vset.pattern.permute.xlu0 0
      %346 = vperm.xlu0 %345, %v328
      %v347 = vpop.permute.xlu0 %346
      %350 = vset.pattern.permute.xlu0 0
      %351 = vperm.xlu0 %350, %v329
      %v352 = vpop.permute.xlu0 %351
      %355 = vset.pattern.permute.xlu0 0
      %356 = vperm.xlu0 %355, %v330
      %v357 = vpop.permute.xlu0 %356
      %360 = vset.pattern.permute.xlu0 0
      %361 = vperm.xlu0 %360, %v331
      %v362 = vpop.permute.xlu0 %361
      %365 = vset.pattern.permute.xlu0 0
      %366 = vperm.xlu0 %365, %v332
      %v367 = vpop.permute.xlu0 %366
      %370 = vset.pattern.permute.xlu0 0
      %371 = vperm.xlu0 %370, %v333
      %v372 = vpop.permute.xlu0 %371
      %375 = vset.pattern.permute.xlu0 0
      %376 = vperm.xlu0 %375, %v334
      %v377 = vpop.permute.xlu0 %376
      %380 = vset.pattern.permute.xlu0 0
      %381 = vperm.xlu0 %380, %v335
      %v382 = vpop.permute.xlu0 %381
      %385 = vset.pattern.permute.xlu0 0
      %386 = vperm.xlu0 %385, %v336
      %v387 = vpop.permute.xlu0 %386
      %390 = vset.pattern.permute.xlu0 0
      %391 = vperm.xlu0 %390, %v337
      %v392 = vpop.permute.xlu0 %391
      %395 = vset.pattern.permute.xlu0 0
      %396 = vperm.xlu0 %395, %v338
      %v397 = vpop.permute.xlu0 %396
      %400 = vset.pattern.permute.xlu0 0
      %401 = vperm.xlu0 %400, %v339
      %v402 = vpop.permute.xlu0 %401
      %405 = vset.pattern.permute.xlu0 0
      %406 = vperm.xlu0 %405, %v340
      %v407 = vpop.permute.xlu0 %406
      %410 = vset.pattern.permute.xlu0 0
      %411 = vperm.xlu0 %410, %v341
      %v412 = vpop.permute.xlu0 %411
      %415 = vset.pattern.permute.xlu0 0
      %416 = vperm.xlu0 %415, %v342
      %v417 = vpop.permute.xlu0 %416
      %420 = vset.pattern.permute.xlu0 0
      %421 = vperm.xlu0 %420, %v343
      %v422 = vpop.permute.xlu0 %421
      %v424 = vmul.f32 %v312, %v347
      %v425 = vmul.f32 %v313, %v352
      %v426 = vmul.f32 %v314, %v357
      %v427 = vmul.f32 %v315, %v362
      %v428 = vmul.f32 %v316, %v367
      %v429 = vmul.f32 %v317, %v372
      %v430 = vmul.f32 %v318, %v377
      %v431 = vmul.f32 %v319, %v382
      %v432 = vmul.f32 %v320, %v387
      %v433 = vmul.f32 %v321, %v392
      %v434 = vmul.f32 %v322, %v397
      %v435 = vmul.f32 %v323, %v402
      %v436 = vmul.f32 %v324, %v407
      %v437 = vmul.f32 %v325, %v412
      %v438 = vmul.f32 %v326, %v417
      %v439 = vmul.f32 %v327, %v422
      %v440 = vpack.c.bf16 %v425, %v424
      %v441 = vpack.c.bf16 %v427, %v426
      %v442 = vpack.c.bf16 %v429, %v428
      %v443 = vpack.c.bf16 %v431, %v430
      %v444 = vpack.c.bf16 %v433, %v432
      %v445 = vpack.c.bf16 %v435, %v434
      %v446 = vpack.c.bf16 %v437, %v436
      %v447 = vpack.c.bf16 %v439, %v438
      %v456 = vunpack.c.l.b16 %v440
      %v457 = vunpack.c.h.b16 %v440
      %v458 = vunpack.c.l.b16 %v441
      %v459 = vunpack.c.h.b16 %v441
      %v460 = vunpack.c.l.b16 %v442
      %v461 = vunpack.c.h.b16 %v442
      %v462 = vunpack.c.l.b16 %v443
      %v463 = vunpack.c.h.b16 %v443
      %v464 = vunpack.c.l.b16 %v444
      %v465 = vunpack.c.h.b16 %v444
      %v466 = vunpack.c.l.b16 %v445
      %v467 = vunpack.c.h.b16 %v445
      %v468 = vunpack.c.l.b16 %v446
      %v469 = vunpack.c.h.b16 %v446
      %v470 = vunpack.c.l.b16 %v447
      %v471 = vunpack.c.h.b16 %v447
      %v472 = vpack.c.b16 %v456, %v456
      %v473 = vpack.c.b16 %v457, %v457
      %v474 = vpack.c.b16 %v458, %v458
      %v475 = vpack.c.b16 %v459, %v459
      %v476 = vpack.c.b16 %v460, %v460
      %v477 = vpack.c.b16 %v461, %v461
      %v478 = vpack.c.b16 %v462, %v462
      %v479 = vpack.c.b16 %v463, %v463
      %v480 = vpack.c.b16 %v464, %v464
      %v481 = vpack.c.b16 %v465, %v465
      %v482 = vpack.c.b16 %v466, %v466
      %v483 = vpack.c.b16 %v467, %v467
      %v484 = vpack.c.b16 %v468, %v468
      %v485 = vpack.c.b16 %v469, %v469
      %v486 = vpack.c.b16 %v470, %v470
      %v487 = vpack.c.b16 %v471, %v471
      %504 = vst [vmem:[#allocation3] sm:$0xf] %v472
      %505 = vst [vmem:[#allocation3 + $0x4] sm:$0xf] %v473
      %506 = vst [vmem:[#allocation3 + $0x8] sm:$0xf] %v474
      %507 = vst [vmem:[#allocation3 + $0xc] sm:$0xf] %v475
      %508 = vst [vmem:[#allocation3 + $0x10] sm:$0xf] %v476
      %509 = vst [vmem:[#allocation3 + $0x14] sm:$0xf] %v477
      %510 = vst [vmem:[#allocation3 + $0x18] sm:$0xf] %v478
      %511 = vst [vmem:[#allocation3 + $0x1c] sm:$0xf] %v479
      %512 = vst [vmem:[#allocation3 + $0x20] sm:$0xf] %v480
      %513 = vst [vmem:[#allocation3 + $0x24] sm:$0xf] %v481
      %514 = vst [vmem:[#allocation3 + $0x28] sm:$0xf] %v482
      %515 = vst [vmem:[#allocation3 + $0x2c] sm:$0xf] %v483
      %516 = vst [vmem:[#allocation3 + $0x30] sm:$0xf] %v484
      %517 = vst [vmem:[#allocation3 + $0x34] sm:$0xf] %v485
      %518 = vst [vmem:[#allocation3 + $0x38] sm:$0xf] %v486
      %519 = vst [vmem:[#allocation3 + $0x3c] sm:$0xf] %v487
    $region21: #{tpu_custom_call.1} parent=1 // pred_fallthru
      _
    // Predicated region
    $region22: #{tpu_custom_call.1} parent=1 // pred_check
      _
    $region23: #{tpu_custom_call.1} parent=1 // pred_check_branch
      %521 = sbr.rel (0) target = $region25
    $region24: #{tpu_custom_call.1} parent=1 // pred_region
      %s523 = ssub.s32 1024, 1024
      %524 = vsyncadd [#allocation4], %s523
      %s525 = sshll.u32 [#allocation3], 4
      %s526 = int_to_ptr.vmem [resolvable:$true] %s525
      %531 = dma.vmem_to_hbm [thread:$0]  %s526, 1024, %s3, [#allocation4], 64, 64, 4
    $region25: #{tpu_custom_call.1} parent=1 // pred_fallthru
      _
    // Predicated region
    $region26: #{tpu_custom_call.1} parent=1 // pred_check
      _
    $region27: #{tpu_custom_call.1} parent=1 // pred_check_branch
      %533 = sbr.rel (0) target = $region29
    $region28: #{tpu_custom_call.1} parent=1 // pred_region
      %534 = dma.done [#allocation4], 1024
    $region29: #{tpu_custom_call.1} parent=1 // pred_fallthru
      _
    %535 = vsyncpa [#allocation4], 1

</llo_original>
